<compile_context>
chip_gen: v5e
topology: v5e:2x2
jax: 0.10.0
libtpu: 0.0.40
codegen_flags: <defaults>
</compile_context>

<pallas_src>
import functools

import jax
import jax.numpy as jnp
from jax import lax
from jax.experimental import pallas as pl
from jax.experimental.pallas import tpu as pltpu


def additive_attention_kernel(q_ref, k_ref, v_ref, wq_ref, wk_ref, ws_ref,
                              bias_ref, ctx_ref, attn_ref):
    tb, L, D = k_ref.shape

    q = q_ref[...]                                   # (TB, D)
    k2 = k_ref[...].reshape(tb * L, D)               # (TB*L, D) — leading-dim collapse
    v = v_ref[...]                                   # (TB, L, D)

    # Projections on the MXU. Contract W's dim 1 (== x @ W.T) so the weights
    # stay in their PyTorch storage layout — no transposed HBM copy needed.
    dn = (((1,), (1,)), ((), ()))
    qp = lax.dot_general(q, wq_ref[...], dn,
                         preferred_element_type=jnp.float32)       # (TB, D)
    kp = lax.dot_general(k2, wk_ref[...], dn,
                         preferred_element_type=jnp.float32)       # (TB*L, D)

    # Fold the additive bias into the small query projection before broadcast.
    qpb = qp + bias_ref[...]                                       # (TB, D)

    h = jnp.tanh(kp.reshape(tb, L, D) + qpb[:, None, :])           # (TB, L, D)

    # score_proj as VPU multiply + lane (XLU) reduce — no N=1 MXU matvec.
    # The score_proj bias is dropped: softmax shift-invariance makes it a no-op.
    ws_row = ws_ref[...].reshape(1, 1, D)                          # (1, 1, D)
    score = jnp.sum(h * ws_row, axis=-1)                           # (TB, L)

    # Numerically stable softmax over L; reciprocal goes to the EUP.
    m = jnp.max(score, axis=-1, keepdims=True)                     # (TB, 1)
    e = jnp.exp(score - m)                                         # (TB, L)
    denom = jnp.sum(e, axis=-1, keepdims=True)                     # (TB, 1)
    attn = e * pl.reciprocal(denom, approx=True)                   # (TB, L)

    # context = attn @ value + query, as broadcast-mul + sublane reduce
    # (avoids the M=1 MXU matmul and the attn.T relayout).
    ctx = jnp.sum(attn[:, :, None] * v, axis=1) + q                # (TB, D)

    ctx_ref[...] = ctx.astype(ctx_ref.dtype)
    attn_ref[...] = attn.astype(attn_ref.dtype)


@functools.partial(jax.jit, static_argnames=("tb",))
def additive_attention(query, key, value, wq, wk, ws, bias, *, tb=8):
    """query: (B,1,D), key/value: (B,L,D). Returns (context (B,1,D), attn (B,L))."""
    B, QL, D = query.shape
    _, L, _ = key.shape
    assert QL == 1, "additive attention decoder step expects q_len == 1"

    num_blocks = -(-B // tb)
    Bp = num_blocks * tb

    q2 = query.reshape(B, D).astype(jnp.float32)
    k3 = key.astype(jnp.float32)
    v3 = value.astype(jnp.float32)
    if Bp != B:  # pad batch up to a multiple of the batch tile
        pad = Bp - B
        q2 = jnp.pad(q2, ((0, pad), (0, 0)))
        k3 = jnp.pad(k3, ((0, pad), (0, 0), (0, 0)))
        v3 = jnp.pad(v3, ((0, pad), (0, 0), (0, 0)))

    ws2 = ws.reshape(1, D).astype(jnp.float32)
    bias2 = bias.reshape(1, D).astype(jnp.float32)
    wq_f = wq.astype(jnp.float32)
    wk_f = wk.astype(jnp.float32)

    grid_spec = pltpu.PrefetchScalarGridSpec(
        num_scalar_prefetch=0,
        grid=(num_blocks,),
        in_specs=[
            pl.BlockSpec((tb, D), lambda b: (b, 0)),        # query  (Bp, D)
            pl.BlockSpec((tb, L, D), lambda b: (b, 0, 0)),  # key    (Bp, L, D)
            pl.BlockSpec((tb, L, D), lambda b: (b, 0, 0)),  # value  (Bp, L, D)
            pl.BlockSpec((D, D), lambda b: (0, 0)),         # Wq (PyTorch layout)
            pl.BlockSpec((D, D), lambda b: (0, 0)),         # Wk (PyTorch layout)
            pl.BlockSpec((1, D), lambda b: (0, 0)),         # Ws row
            pl.BlockSpec((1, D), lambda b: (0, 0)),         # additive bias
        ],
        out_specs=[
            pl.BlockSpec((tb, D), lambda b: (b, 0)),        # context (Bp, D)
            pl.BlockSpec((tb, L), lambda b: (b, 0)),        # attn    (Bp, L)
        ],
    )

    ctx, attn = pl.pallas_call(
        additive_attention_kernel,
        out_shape=(
            jax.ShapeDtypeStruct((Bp, D), jnp.float32),
            jax.ShapeDtypeStruct((Bp, L), jnp.float32),
        ),
        grid_spec=grid_spec,
        compiler_params=pltpu.CompilerParams(
            dimension_semantics=("parallel",)),
    )(q2, k3, v3, wq_f, wk_f, ws2, bias2)

    return ctx[:B].reshape(B, 1, D), attn[:B]


def additive_attention_reference(query, key, value, wq, wk, ws, bs, bias):
    qp = query @ wq.T                              # (B, 1, D)
    kp = key @ wk.T                                # (B, L, D)
    h = jnp.tanh(kp + qp + bias)                   # (B, L, D)
    score = (h @ ws.T + bs)[..., 0]                # (B, L)
    attn = jax.nn.softmax(score, axis=-1)          # (B, L)
    ctx = jnp.einsum("bl,bld->bd", attn, value)[:, None, :] + query
    return ctx, attn


if __name__ == "__main__":
    B, L, D = 16, 8, 32  # batch, key/value length, model dim (q_len = 1)
    TB = 8               # batch tile per grid step -> grid = (2,) (2 parallel steps)

    key0 = jax.random.PRNGKey(0)
    k_q, k_k, k_v, k_wq, k_wk, k_ws, k_bs, k_b = jax.random.split(key0, 8)

    query = jax.random.normal(k_q, (B, 1, D), dtype=jnp.float32)
    keyT = jax.random.normal(k_k, (B, L, D), dtype=jnp.float32)
    value = jax.random.normal(k_v, (B, L, D), dtype=jnp.float32)

    # Deterministic synthetic parameters (same shapes as the PyTorch module).
    wq = jax.random.uniform(k_wq, (D, D), minval=-0.1, maxval=0.1, dtype=jnp.float32)
    wk = jax.random.uniform(k_wk, (D, D), minval=-0.1, maxval=0.1, dtype=jnp.float32)
    ws = jax.random.uniform(k_ws, (1, D), minval=-0.1, maxval=0.1, dtype=jnp.float32)
    bs = jax.random.uniform(k_bs, (1,), minval=-0.1, maxval=0.1, dtype=jnp.float32)
    bias = jax.random.uniform(k_b, (D,), minval=-0.1, maxval=0.1, dtype=jnp.float32)

    ctx, attn = additive_attention(query, keyT, value, wq, wk, ws, bias, tb=TB)
    jax.block_until_ready((ctx, attn))

    # Reference keeps the score_proj bias (PyTorch module); the kernel drops it
    # because softmax is shift-invariant, so results agree.
    ctx_ref, attn_ref = additive_attention_reference(
        query, keyT, value, wq, wk, ws, bs, bias)

    assert ctx.shape == (B, 1, D) and attn.shape == (B, L)
    # Tolerances sized for the EUP approximate reciprocal used in the softmax.
    assert jnp.allclose(ctx, ctx_ref, atol=2e-3, rtol=1e-3)
    assert jnp.allclose(attn, attn_ref, atol=1e-3, rtol=1e-3)

    print("KERNEL_OK")
</pallas_src>

<mosaic_0001>
module attributes {stable_mosaic.version = 11 : i64} {
  func.func @additive_attention_kernel(%arg0: i32, %arg1: memref<8x32xf32, #tpu.memory_space<vmem>>, %arg2: memref<8x8x32xf32, #tpu.memory_space<vmem>>, %arg3: memref<8x8x32xf32, #tpu.memory_space<vmem>>, %arg4: memref<32x32xf32, #tpu.memory_space<vmem>>, %arg5: memref<32x32xf32, #tpu.memory_space<vmem>>, %arg6: memref<1x32xf32, #tpu.memory_space<vmem>>, %arg7: memref<1x32xf32, #tpu.memory_space<vmem>>, %arg8: memref<8x32xf32, #tpu.memory_space<vmem>>, %arg9: memref<8x8xf32, #tpu.memory_space<vmem>>) attributes {dimension_semantics = [#tpu.dimension_semantics<parallel>], iteration_bounds = array<i64: 2>, scalar_prefetch = 0 : i64, scratch_operands = 0 : i64, tpu.core_type = #tpu.core_type<tc>, window_params = [{transform_indices = @transform_0, window_bounds = array<i64: 8, 32>}, {transform_indices = @transform_1, window_bounds = array<i64: 8, 8, 32>}, {transform_indices = @transform_2, window_bounds = array<i64: 8, 8, 32>}, {pipeline_mode = #tpu.pipeline_mode<synchronous>, transform_indices = @transform_3, window_bounds = array<i64: 32, 32>}, {pipeline_mode = #tpu.pipeline_mode<synchronous>, transform_indices = @transform_4, window_bounds = array<i64: 32, 32>}, {pipeline_mode = #tpu.pipeline_mode<synchronous>, transform_indices = @transform_5, window_bounds = array<i64: 1, 32>}, {pipeline_mode = #tpu.pipeline_mode<synchronous>, transform_indices = @transform_6, window_bounds = array<i64: 1, 32>}, {transform_indices = @transform_7, window_bounds = array<i64: 8, 32>}, {transform_indices = @transform_8, window_bounds = array<i64: 8, 8>}]} {
    %c0 = arith.constant 0 : index
    %c0_0 = arith.constant 0 : index
    %0 = vector.load %arg1[%c0, %c0_0] : memref<8x32xf32, #tpu.memory_space<vmem>>, vector<8x32xf32>
    %c0_1 = arith.constant 0 : index
    %c0_2 = arith.constant 0 : index
    %c0_3 = arith.constant 0 : index
    %1 = vector.load %arg2[%c0_1, %c0_2, %c0_3] : memref<8x8x32xf32, #tpu.memory_space<vmem>>, vector<8x8x32xf32>
    %2 = vector.shape_cast %1 : vector<8x8x32xf32> to vector<64x32xf32>
    %c0_4 = arith.constant 0 : index
    %c0_5 = arith.constant 0 : index
    %c0_6 = arith.constant 0 : index
    %3 = vector.load %arg3[%c0_4, %c0_5, %c0_6] : memref<8x8x32xf32, #tpu.memory_space<vmem>>, vector<8x8x32xf32>
    %c0_7 = arith.constant 0 : index
    %c0_8 = arith.constant 0 : index
    %4 = vector.load %arg4[%c0_7, %c0_8] : memref<32x32xf32, #tpu.memory_space<vmem>>, vector<32x32xf32>
    %cst = arith.constant dense<0.000000e+00> : vector<8x32xf32>
    %5 = tpu.matmul %0, %4, %cst {dimension_numbers = #tpu.dot_dimension_numbers<[1], [1], [0], [0], [0, 0, 1, 0], [], []>} : vector<8x32xf32>, vector<32x32xf32>, vector<8x32xf32> -> vector<8x32xf32>
    %c0_9 = arith.constant 0 : index
    %c0_10 = arith.constant 0 : index
    %6 = vector.load %arg5[%c0_9, %c0_10] : memref<32x32xf32, #tpu.memory_space<vmem>>, vector<32x32xf32>
    %cst_11 = arith.constant dense<0.000000e+00> : vector<64x32xf32>
    %7 = tpu.matmul %2, %6, %cst_11 {dimension_numbers = #tpu.dot_dimension_numbers<[1], [1], [0], [0], [0, 0, 1, 0], [], []>} : vector<64x32xf32>, vector<32x32xf32>, vector<64x32xf32> -> vector<64x32xf32>
    %c0_12 = arith.constant 0 : index
    %c0_13 = arith.constant 0 : index
    %8 = vector.load %arg7[%c0_12, %c0_13] : memref<1x32xf32, #tpu.memory_space<vmem>>, vector<1x32xf32>
    %9 = vector.broadcast %8 : vector<1x32xf32> to vector<8x32xf32>
    %10 = arith.addf %5, %9 : vector<8x32xf32>
    %11 = vector.shape_cast %7 : vector<64x32xf32> to vector<8x8x32xf32>
    %12 = vector.shape_cast %10 : vector<8x32xf32> to vector<8x1x32xf32>
    %13 = vector.broadcast %12 : vector<8x1x32xf32> to vector<8x8x32xf32>
    %14 = arith.addf %11, %13 : vector<8x8x32xf32>
    %15 = math.tanh %14 : vector<8x8x32xf32>
    %c0_14 = arith.constant 0 : index
    %c0_15 = arith.constant 0 : index
    %16 = vector.load %arg6[%c0_14, %c0_15] : memref<1x32xf32, #tpu.memory_space<vmem>>, vector<1x32xf32>
    %17 = vector.shape_cast %16 : vector<1x32xf32> to vector<1x1x32xf32>
    %18 = vector.broadcast %17 : vector<1x1x32xf32> to vector<8x8x32xf32>
    %19 = arith.mulf %15, %18 : vector<8x8x32xf32>
    %cst_16 = arith.constant dense<0.000000e+00> : vector<8x8xf32>
    %20 = vector.multi_reduction <add>, %19, %cst_16 [2] : vector<8x8x32xf32> to vector<8x8xf32>
    %cst_17 = arith.constant dense<0xFF800000> : vector<8xf32>
    %21 = vector.multi_reduction <maximumf>, %20, %cst_17 [1] : vector<8x8xf32> to vector<8xf32>
    %22 = vector.shape_cast %21 : vector<8xf32> to vector<8x1xf32>
    %23 = vector.broadcast %22 : vector<8x1xf32> to vector<8x8xf32>
    %24 = arith.subf %20, %23 : vector<8x8xf32>
    %25 = math.exp %24 : vector<8x8xf32>
    %cst_18 = arith.constant dense<0.000000e+00> : vector<8xf32>
    %26 = vector.multi_reduction <add>, %25, %cst_18 [1] : vector<8x8xf32> to vector<8xf32>
    %27 = vector.shape_cast %26 : vector<8xf32> to vector<8x1xf32>
    %28 = tpu.reciprocal %27 {approx = true} : vector<8x1xf32> -> vector<8x1xf32>
    %29 = vector.broadcast %28 : vector<8x1xf32> to vector<8x8xf32>
    %30 = arith.mulf %25, %29 : vector<8x8xf32>
    %31 = vector.shape_cast %30 : vector<8x8xf32> to vector<8x8x1xf32>
    %32 = vector.broadcast %31 : vector<8x8x1xf32> to vector<8x8x32xf32>
    %33 = arith.mulf %32, %3 : vector<8x8x32xf32>
    %cst_19 = arith.constant dense<0.000000e+00> : vector<8x32xf32>
    %34 = vector.multi_reduction <add>, %33, %cst_19 [1] : vector<8x8x32xf32> to vector<8x32xf32>
    %35 = arith.addf %34, %0 : vector<8x32xf32>
    %c0_20 = arith.constant 0 : index
    %c0_21 = arith.constant 0 : index
    %36 = vector.load %arg8[%c0_20, %c0_21] : memref<8x32xf32, #tpu.memory_space<vmem>>, vector<8x32xf32>
    tpu.vector_store %arg8[%c0_20, %c0_21], %35 {strides = array<i32>} : memref<8x32xf32, #tpu.memory_space<vmem>>, vector<8x32xf32>,
    %c0_22 = arith.constant 0 : index
    %c0_23 = arith.constant 0 : index
    %37 = vector.load %arg9[%c0_22, %c0_23] : memref<8x8xf32, #tpu.memory_space<vmem>>, vector<8x8xf32>
    tpu.vector_store %arg9[%c0_22, %c0_23], %30 {strides = array<i32>} : memref<8x8xf32, #tpu.memory_space<vmem>>, vector<8x8xf32>,
    return
  }
  func.func @transform_0(%arg0: i32) -> (i32, i32) {
    %c0_i32 = arith.constant 0 : i32
    %c0_i32_0 = arith.constant 0 : i32
    return %arg0, %c0_i32 : i32, i32
  }
  func.func @transform_1(%arg0: i32) -> (i32, i32, i32) {
    %c0_i32 = arith.constant 0 : i32
    %c0_i32_0 = arith.constant 0 : i32
    %c0_i32_1 = arith.constant 0 : i32
    return %arg0, %c0_i32, %c0_i32_0 : i32, i32, i32
  }
  func.func @transform_2(%arg0: i32) -> (i32, i32, i32) {
    %c0_i32 = arith.constant 0 : i32
    %c0_i32_0 = arith.constant 0 : i32
    %c0_i32_1 = arith.constant 0 : i32
    return %arg0, %c0_i32, %c0_i32_0 : i32, i32, i32
  }
  func.func @transform_3(%arg0: i32) -> (i32, i32) {
    %c0_i32 = arith.constant 0 : i32
    %c0_i32_0 = arith.constant 0 : i32
    %c0_i32_1 = arith.constant 0 : i32
    return %c0_i32, %c0_i32_0 : i32, i32
  }
  func.func @transform_4(%arg0: i32) -> (i32, i32) {
    %c0_i32 = arith.constant 0 : i32
    %c0_i32_0 = arith.constant 0 : i32
    %c0_i32_1 = arith.constant 0 : i32
    return %c0_i32, %c0_i32_0 : i32, i32
  }
  func.func @transform_5(%arg0: i32) -> (i32, i32) {
    %c0_i32 = arith.constant 0 : i32
    %c0_i32_0 = arith.constant 0 : i32
    %c0_i32_1 = arith.constant 0 : i32
    return %c0_i32, %c0_i32_0 : i32, i32
  }
  func.func @transform_6(%arg0: i32) -> (i32, i32) {
    %c0_i32 = arith.constant 0 : i32
    %c0_i32_0 = arith.constant 0 : i32
    %c0_i32_1 = arith.constant 0 : i32
    return %c0_i32, %c0_i32_0 : i32, i32
  }
  func.func @transform_7(%arg0: i32) -> (i32, i32) {
    %c0_i32 = arith.constant 0 : i32
    %c0_i32_0 = arith.constant 0 : i32
    return %arg0, %c0_i32 : i32, i32
  }
  func.func @transform_8(%arg0: i32) -> (i32, i32) {
    %c0_i32 = arith.constant 0 : i32
    %c0_i32_0 = arith.constant 0 : i32
    return %arg0, %c0_i32 : i32, i32
  }
}

</mosaic_0001>

<llo_original>
// kernel: additive_attention.1
$region0: #{additive_attention.1}
  #allocation0 [shape = 'u32[]', space=smem, size = 0x4, offset = 0x4, fixed_abs, tag = 'smem constant byte address 0x4 - core index']
  #allocation1 [shape = 'u32[72,128]{1,0:T(1,128)}', space=vmem, size = 0x9000, scoped, tag = 'internal scratch']
  %s0 = inlined_call_operand.hbm [shape: f32[16,32], index: 0, kind: input, shape index: {}]
  %s1 = inlined_call_operand.hbm [shape: f32[16,8,32], index: 1, kind: input, shape index: {}]
  %s2 = inlined_call_operand.hbm [shape: f32[16,8,32], index: 2, kind: input, shape index: {}]
  %s3 = inlined_call_operand.hbm [shape: f32[32,32], index: 3, kind: input, shape index: {}]
  %s4 = inlined_call_operand.hbm [shape: f32[32,32], index: 4, kind: input, shape index: {}]
  %s5 = inlined_call_operand.vmem [shape: f32[1,32], index: 5, kind: input, shape index: {}]
  %s6 = inlined_call_operand.vmem [shape: f32[1,32], index: 6, kind: input, shape index: {}]
  %s7 = inlined_call_operand.hbm [shape: f32[16,32], index: 7, kind: output, shape index: {0}]
  %s8 = inlined_call_operand.vmem [shape: f32[16,8], index: 8, kind: output, shape index: {1}]
  %9 = xla_tuple %s7, %s8
  %s10 = sld [smem:[#allocation0]]
  $region89: #{additive_attention.1} parent=0
    _
  %s12 = ssub.s32 1, %s10
  %s13 = scalar_select 0, %s12, %s10
  $region1: #{additive_attention.1} parent=0
    #allocation2 [shape = 'u8[8192]{0}', space=vmem, size = 0x2000, scoped, tag = 'input window, operand 0']
    #allocation3 [shape = 's32[2]{0}', space=sflag, size = 0x8, scoped, tag = 'scoped memory for additive_attention.1']
    #allocation4 [shape = 's32[2]{0}', space=sflag, size = 0x8, scoped, tag = 'scoped memory for additive_attention.1']
    #allocation5 [shape = 'u8[65536]{0}', space=vmem, size = 0x10000, scoped, tag = 'input window, operand 1']
    #allocation6 [shape = 's32[2]{0}', space=sflag, size = 0x8, scoped, tag = 'scoped memory for additive_attention.1']
    #allocation7 [shape = 'u8[65536]{0}', space=vmem, size = 0x10000, scoped, tag = 'input window, operand 2']
    #allocation8 [shape = 'u8[16384]{0}', space=vmem, size = 0x4000, scoped, tag = 'input window, operand 3, single buffered']
    #allocation9 [shape = 's32[1]{0}', space=sflag, size = 0x4, scoped, tag = 'scoped memory for additive_attention.1']
    #allocation10 [shape = 'u8[16384]{0}', space=vmem, size = 0x4000, scoped, tag = 'input window, operand 4, single buffered']
    #allocation11 [shape = 'u8[8192]{0}', space=vmem, size = 0x2000, scoped, tag = 'output window, operand 0']
    %14 = vsyncpa [#allocation3], 0
    %s15 = scalar_lea.sflag [#allocation3], 1
    %16 = vsyncpa %s15, 0
    %17 = vsyncpa [#allocation6], 0
    %s18 = scalar_lea.sflag [#allocation6], 1
    %19 = vsyncpa %s18, 0
    %20 = vsyncpa [#allocation9], 0
    %21 = vsyncpa [#allocation4], 0
    %s22 = scalar_lea.sflag [#allocation4], 1
    %23 = vsyncpa %s22, 0
    loop: start=0, step=1, limit=4
    $region2: #{additive_attention.1} parent=1 // loop_pre_header
      _
    $region3: #{additive_attention.1} parent=1 // loop_header
      %s25 = sphi 0, %s29
      %p26 = scmp.ge.s32.totalorder %s25, 4
      %s35 = sphi 0, %s37
      %s38 = sphi 0, %s35
      %s39 = sphi 0, %s38
      %s55 = sphi 0, %s39
      %s61 = sphi 0, %s63
      %s64 = sphi 0, %s61
      %s65 = sphi 0, %s64
      %s81 = sphi 0, %s65
      %s87 = sphi 0, %s89
      %s90 = sphi 0, %s87
      %s91 = sphi 0, %s90
      %s107 = sphi 0, %s91
      %s111 = sphi 0, %s111
      %s113 = sphi 0, %s111
      %s114 = sphi 0, %s113
      %s128 = sphi 0, %s114
      %s132 = sphi 0, %s132
      %s134 = sphi 0, %s132
      %s135 = sphi 0, %s134
      %s149 = sphi 0, %s135
      %s153 = sphi 0, %s153
      %s155 = sphi 0, %s153
      %s156 = sphi 0, %s155
      %s170 = sphi 0, %s156
      %s174 = sphi 0, %s174
      %s176 = sphi 0, %s174
      %s177 = sphi 0, %s176
      %s191 = sphi 0, %s177
      %s197 = sphi 0, %s199
      %s200 = sphi 0, %s197
      %s201 = sphi 0, %s200
      %s217 = sphi 0, %s201
      %s223 = sphi 0, %s225
      %s226 = sphi 0, %s223
      %s227 = sphi 0, %s226
      %s243 = sphi 0, %s227
    $region4: #{additive_attention.1} parent=1 // loop_header_branch
      %28 = sbr.rel (%p26) target = $region8
    $region5: #{additive_attention.1} parent=1 // loop_body
      %s30 = ssub.s32 %s25, 1
      %s31 = ssub.s32 %s25, 2
      %s32 = sadd.s32 %s25, 1
      %s33 = ssub.s32 %s25, %s32
      %p34 = scmp.eq.s32.totalorder %s33, 0
      %s36 = sadd.s32 %s35, 1
      %s37 = scalar_select %p34, %s35, %s36
      %p40 = pneg %p34
      %p41 = scmp.eq.s32.totalorder %s25, 1
      %p42 = por %p40, %p41
      %p43 = scmp.ne.s32.totalorder %s35, %s38
      %p44 = scmp.eq.s32.totalorder %s25, 0
      %p45 = por %p43, %p44
      %p46 = scmp.ne.s32.totalorder %s35, %s38
      %p47 = scmp.eq.s32.totalorder %s30, 1
      %p48 = por %p46, %p47
      %p49 = scmp.ne.s32.totalorder %s38, %s39
      %p50 = scmp.eq.s32.totalorder %s30, 0
      %p51 = por %p49, %p50
      %p52 = scmp.ne.s32.totalorder %s38, %s39
      %p53 = scmp.eq.s32.totalorder %s31, 1
      %p54 = por %p52, %p53
      %p56 = scmp.ne.s32.totalorder %s39, %s55
      %p57 = scmp.eq.s32.totalorder %s31, 0
      %p58 = por %p56, %p57
      %s59 = ssub.s32 %s25, %s32
      %p60 = scmp.eq.s32.totalorder %s59, 0
      %s62 = sadd.s32 %s61, 1
      %s63 = scalar_select %p60, %s61, %s62
      %p66 = pneg %p60
      %p67 = scmp.eq.s32.totalorder %s25, 1
      %p68 = por %p66, %p67
      %p69 = scmp.ne.s32.totalorder %s61, %s64
      %p70 = scmp.eq.s32.totalorder %s25, 0
      %p71 = por %p69, %p70
      %p72 = scmp.ne.s32.totalorder %s61, %s64
      %p73 = scmp.eq.s32.totalorder %s30, 1
      %p74 = por %p72, %p73
      %p75 = scmp.ne.s32.totalorder %s64, %s65
      %p76 = scmp.eq.s32.totalorder %s30, 0
      %p77 = por %p75, %p76
      %p78 = scmp.ne.s32.totalorder %s64, %s65
      %p79 = scmp.eq.s32.totalorder %s31, 1
      %p80 = por %p78, %p79
      %p82 = scmp.ne.s32.totalorder %s65, %s81
      %p83 = scmp.eq.s32.totalorder %s31, 0
      %p84 = por %p82, %p83
      %s85 = ssub.s32 %s25, %s32
      %p86 = scmp.eq.s32.totalorder %s85, 0
      %s88 = sadd.s32 %s87, 1
      %s89 = scalar_select %p86, %s87, %s88
      %p92 = pneg %p86
      %p93 = scmp.eq.s32.totalorder %s25, 1
      %p94 = por %p92, %p93
      %p95 = scmp.ne.s32.totalorder %s87, %s90
      %p96 = scmp.eq.s32.totalorder %s25, 0
      %p97 = por %p95, %p96
      %p98 = scmp.ne.s32.totalorder %s87, %s90
      %p99 = scmp.eq.s32.totalorder %s30, 1
      %p100 = por %p98, %p99
      %p101 = scmp.ne.s32.totalorder %s90, %s91
      %p102 = scmp.eq.s32.totalorder %s30, 0
      %p103 = por %p101, %p102
      %p104 = scmp.ne.s32.totalorder %s90, %s91
      %p105 = scmp.eq.s32.totalorder %s31, 1
      %p106 = por %p104, %p105
      %p108 = scmp.ne.s32.totalorder %s91, %s107
      %p109 = scmp.eq.s32.totalorder %s31, 0
      %p110 = por %p108, %p109
      %s112 = sadd.s32 %s111, 1
      %p115 = scmp.eq.s32.totalorder %s25, 1
      %p116 = scmp.ne.s32.totalorder %s111, %s113
      %p117 = scmp.eq.s32.totalorder %s25, 0
      %p118 = por %p116, %p117
      %p119 = scmp.ne.s32.totalorder %s111, %s113
      %p120 = scmp.eq.s32.totalorder %s30, 1
      %p121 = por %p119, %p120
      %p122 = scmp.ne.s32.totalorder %s113, %s114
      %p123 = scmp.eq.s32.totalorder %s30, 0
      %p124 = por %p122, %p123
      %p125 = scmp.ne.s32.totalorder %s113, %s114
      %p126 = scmp.eq.s32.totalorder %s31, 1
      %p127 = por %p125, %p126
      %p129 = scmp.ne.s32.totalorder %s114, %s128
      %p130 = scmp.eq.s32.totalorder %s31, 0
      %p131 = por %p129, %p130
      %s133 = sadd.s32 %s132, 1
      %p136 = scmp.eq.s32.totalorder %s25, 1
      %p137 = scmp.ne.s32.totalorder %s132, %s134
      %p138 = scmp.eq.s32.totalorder %s25, 0
      %p139 = por %p137, %p138
      %p140 = scmp.ne.s32.totalorder %s132, %s134
      %p141 = scmp.eq.s32.totalorder %s30, 1
      %p142 = por %p140, %p141
      %p143 = scmp.ne.s32.totalorder %s134, %s135
      %p144 = scmp.eq.s32.totalorder %s30, 0
      %p145 = por %p143, %p144
      %p146 = scmp.ne.s32.totalorder %s134, %s135
      %p147 = scmp.eq.s32.totalorder %s31, 1
      %p148 = por %p146, %p147
      %p150 = scmp.ne.s32.totalorder %s135, %s149
      %p151 = scmp.eq.s32.totalorder %s31, 0
      %p152 = por %p150, %p151
      %s154 = sadd.s32 %s153, 1
      %p157 = scmp.eq.s32.totalorder %s25, 1
      %p158 = scmp.ne.s32.totalorder %s153, %s155
      %p159 = scmp.eq.s32.totalorder %s25, 0
      %p160 = por %p158, %p159
      %p161 = scmp.ne.s32.totalorder %s153, %s155
      %p162 = scmp.eq.s32.totalorder %s30, 1
      %p163 = por %p161, %p162
      %p164 = scmp.ne.s32.totalorder %s155, %s156
      %p165 = scmp.eq.s32.totalorder %s30, 0
      %p166 = por %p164, %p165
      %p167 = scmp.ne.s32.totalorder %s155, %s156
      %p168 = scmp.eq.s32.totalorder %s31, 1
      %p169 = por %p167, %p168
      %p171 = scmp.ne.s32.totalorder %s156, %s170
      %p172 = scmp.eq.s32.totalorder %s31, 0
      %p173 = por %p171, %p172
      %s175 = sadd.s32 %s174, 1
      %p178 = scmp.eq.s32.totalorder %s25, 1
      %p179 = scmp.ne.s32.totalorder %s174, %s176
      %p180 = scmp.eq.s32.totalorder %s25, 0
      %p181 = por %p179, %p180
      %p182 = scmp.ne.s32.totalorder %s174, %s176
      %p183 = scmp.eq.s32.totalorder %s30, 1
      %p184 = por %p182, %p183
      %p185 = scmp.ne.s32.totalorder %s176, %s177
      %p186 = scmp.eq.s32.totalorder %s30, 0
      %p187 = por %p185, %p186
      %p188 = scmp.ne.s32.totalorder %s176, %s177
      %p189 = scmp.eq.s32.totalorder %s31, 1
      %p190 = por %p188, %p189
      %p192 = scmp.ne.s32.totalorder %s177, %s191
      %p193 = scmp.eq.s32.totalorder %s31, 0
      %p194 = por %p192, %p193
      %s195 = ssub.s32 %s25, %s32
      %p196 = scmp.eq.s32.totalorder %s195, 0
      %s198 = sadd.s32 %s197, 1
      %s199 = scalar_select %p196, %s197, %s198
      %p202 = pneg %p196
      %p203 = scmp.eq.s32.totalorder %s25, 1
      %p204 = por %p202, %p203
      %p205 = scmp.ne.s32.totalorder %s197, %s200
      %p206 = scmp.eq.s32.totalorder %s25, 0
      %p207 = por %p205, %p206
      %p208 = scmp.ne.s32.totalorder %s197, %s200
      %p209 = scmp.eq.s32.totalorder %s30, 1
      %p210 = por %p208, %p209
      %p211 = scmp.ne.s32.totalorder %s200, %s201
      %p212 = scmp.eq.s32.totalorder %s30, 0
      %p213 = por %p211, %p212
      %p214 = scmp.ne.s32.totalorder %s200, %s201
      %p215 = scmp.eq.s32.totalorder %s31, 1
      %p216 = por %p214, %p215
      %p218 = scmp.ne.s32.totalorder %s201, %s217
      %p219 = scmp.eq.s32.totalorder %s31, 0
      %p220 = por %p218, %p219
      %s221 = ssub.s32 %s25, %s32
      %p222 = scmp.eq.s32.totalorder %s221, 0
      %s224 = sadd.s32 %s223, 1
      %s225 = scalar_select %p222, %s223, %s224
      %p228 = pneg %p222
      %p229 = scmp.eq.s32.totalorder %s25, 1
      %p230 = por %p228, %p229
      %p231 = scmp.ne.s32.totalorder %s223, %s226
      %p232 = scmp.eq.s32.totalorder %s25, 0
      %p233 = por %p231, %p232
      %p234 = scmp.ne.s32.totalorder %s223, %s226
      %p235 = scmp.eq.s32.totalorder %s30, 1
      %p236 = por %p234, %p235
      %p237 = scmp.ne.s32.totalorder %s226, %s227
      %p238 = scmp.eq.s32.totalorder %s30, 0
      %p239 = por %p237, %p238
      %p240 = scmp.ne.s32.totalorder %s226, %s227
      %p241 = scmp.eq.s32.totalorder %s31, 1
      %p242 = por %p240, %p241
      %p244 = scmp.ne.s32.totalorder %s227, %s243
      %p245 = scmp.eq.s32.totalorder %s31, 0
      %p246 = por %p244, %p245
      %p247 = scmp.le.s32.totalorder 1, %s25
      %p248 = scmp.lt.s32.totalorder %s25, 3
      %p249 = pnand %p247, %p248
      %p250 = pneg %p249
      // Predicated region
      $region9: #{additive_attention.1} parent=5 // pred_check
        _
      $region10: #{additive_attention.1} parent=5 // pred_check_branch
        %252 = sbr.rel (%p249) target = $region12
      $region11: #{additive_attention.1} parent=5 // pred_region
        %s253 = ssub.s32 %s25, 1
        // Predicated region
        $region13: #{additive_attention.1} parent=11 // pred_check
          %p254 = pneg %p124
        $region14: #{additive_attention.1} parent=11 // pred_check_branch
          %256 = sbr.rel (%p254) target = $region16
        $region15: #{additive_attention.1} parent=11 // pred_region
          %258 = vsyncadd [#allocation9], 0
          %s259 = sshll.u32 %s3, 4
          %s260 = int_to_ptr.hbm [resolvable:$true] %s259
          %s261 = sshll.u32 [#allocation8], 4
          %s262 = int_to_ptr.vmem [resolvable:$true] %s261
          %267 = dma.hbm_to_vmem [thread:$0]  %s260, 512, %s262, [#allocation9], 128, 128, 8
        $region16: #{additive_attention.1} parent=11 // pred_fallthru
          _
        // Predicated region
        $region17: #{additive_attention.1} parent=11 // pred_check
          %p268 = pneg %p145
        $region18: #{additive_attention.1} parent=11 // pred_check_branch
          %270 = sbr.rel (%p268) target = $region20
        $region19: #{additive_attention.1} parent=11 // pred_region
          %272 = vsyncadd [#allocation9], 0
          %s273 = sshll.u32 %s4, 4
          %s274 = int_to_ptr.hbm [resolvable:$true] %s273
          %s275 = sshll.u32 [#allocation10], 4
          %s276 = int_to_ptr.vmem [resolvable:$true] %s275
          %281 = dma.hbm_to_vmem [thread:$0]  %s274, 512, %s276, [#allocation9], 128, 128, 8
        $region20: #{additive_attention.1} parent=11 // pred_fallthru
          _
        // Predicated region
        $region21: #{additive_attention.1} parent=11 // pred_check
          %p282 = pneg %p166
        $region22: #{additive_attention.1} parent=11 // pred_check_branch
          %284 = sbr.rel (%p282) target = $region24
        $region23: #{additive_attention.1} parent=11 // pred_region
          _
        $region24: #{additive_attention.1} parent=11 // pred_fallthru
          _
        // Predicated region
        $region25: #{additive_attention.1} parent=11 // pred_check
          %p285 = pneg %p187
        $region26: #{additive_attention.1} parent=11 // pred_check_branch
          %287 = sbr.rel (%p285) target = $region28
        $region27: #{additive_attention.1} parent=11 // pred_region
          _
        $region28: #{additive_attention.1} parent=11 // pred_fallthru
          _
      $region12: #{additive_attention.1} parent=5 // pred_fallthru
        _
      %p288 = scmp.lt.s32.totalorder %s25, 2
      // Predicated region
      $region29: #{additive_attention.1} parent=5 // pred_check
        %p289 = pneg %p288
      $region30: #{additive_attention.1} parent=5 // pred_check_branch
        %291 = sbr.rel (%p289) target = $region32
      $region31: #{additive_attention.1} parent=5 // pred_region
        // Predicated region
        $region33: #{additive_attention.1} parent=31 // pred_check
          %p292 = pneg %p45
        $region34: #{additive_attention.1} parent=31 // pred_check_branch
          %294 = sbr.rel (%p292) target = $region36
        $region35: #{additive_attention.1} parent=31 // pred_region
          %s295 = sand.u32 %s35, 1
          %s296 = scalar_lea.sflag [#allocation3], %s295
          %s297 = sand.u32 %s35, 1
          %s298 = smul.addr %s297, 8
          %s299 = scalar_lea.vmem [#allocation2], %s298
          %301 = vsyncadd %s296, 0
          %s302 = smul.addr %s25, 8
          %s303 = scalar_lea.hbm %s0, %s302
          %s305 = sshll.u32 %s303, 4
          %s306 = int_to_ptr.hbm [resolvable:$true] %s305
          %s307 = sshll.u32 %s299, 4
          %s308 = int_to_ptr.vmem [resolvable:$true] %s307
          %310 = dma.hbm_to_vmem [thread:$0]  %s306, 128, %s308, %s296
        $region36: #{additive_attention.1} parent=31 // pred_fallthru
          _
        // Predicated region
        $region37: #{additive_attention.1} parent=31 // pred_check
          %p311 = pneg %p71
        $region38: #{additive_attention.1} parent=31 // pred_check_branch
          %313 = sbr.rel (%p311) target = $region40
        $region39: #{additive_attention.1} parent=31 // pred_region
          %s314 = sand.u32 %s25, 1
          %s315 = scalar_lea.sflag [#allocation6], %s314
          %s316 = sand.u32 %s61, 1
          %s317 = smul.addr %s316, 64
          %s318 = scalar_lea.vmem [#allocation5], %s317
          %s319 = smul.u32 8, %s25
          %321 = vsyncadd %s315, 0
          %s322 = smul.addr %s319, 8
          %s323 = scalar_lea.hbm %s1, %s322
          %s324 = sshll.u32 %s323, 4
          %s325 = int_to_ptr.hbm [resolvable:$true] %s324
          %s326 = sshll.u32 %s318, 4
          %s327 = int_to_ptr.vmem [resolvable:$true] %s326
          %332 = dma.hbm_to_vmem [thread:$0]  %s325, 1024, %s327, %s315, 128, 128, 8
        $region40: #{additive_attention.1} parent=31 // pred_fallthru
          _
        // Predicated region
        $region41: #{additive_attention.1} parent=31 // pred_check
          %p333 = pneg %p97
        $region42: #{additive_attention.1} parent=31 // pred_check_branch
          %335 = sbr.rel (%p333) target = $region44
        $region43: #{additive_attention.1} parent=31 // pred_region
          %s336 = sand.u32 %s25, 1
          %s337 = scalar_lea.sflag [#allocation6], %s336
          %s338 = sand.u32 %s87, 1
          %s339 = smul.addr %s338, 64
          %s340 = scalar_lea.vmem [#allocation7], %s339
          %s341 = smul.u32 8, %s25
          %343 = vsyncadd %s337, 0
          %s344 = smul.addr %s341, 8
          %s345 = scalar_lea.hbm %s2, %s344
          %s346 = sshll.u32 %s345, 4
          %s347 = int_to_ptr.hbm [resolvable:$true] %s346
          %s348 = sshll.u32 %s340, 4
          %s349 = int_to_ptr.vmem [resolvable:$true] %s348
          %354 = dma.hbm_to_vmem [thread:$0]  %s347, 1024, %s349, %s337, 128, 128, 8
        $region44: #{additive_attention.1} parent=31 // pred_fallthru
          _
      $region32: #{additive_attention.1} parent=5 // pred_fallthru
        _
      %p355 = scmp.le.s32.totalorder 1, %s25
      %p356 = scmp.lt.s32.totalorder %s25, 3
      %p357 = pnand %p355, %p356
      %p358 = pneg %p357
      // Predicated region
      $region45: #{additive_attention.1} parent=5 // pred_check
        _
      $region46: #{additive_attention.1} parent=5 // pred_check_branch
        %360 = sbr.rel (%p357) target = $region48
      $region47: #{additive_attention.1} parent=5 // pred_region
        %s361 = ssub.s32 %s25, 1
        %s362 = sand.u32 %s38, 1
        %s363 = scalar_lea.sflag [#allocation3], %s362
        %s364 = sand.u32 %s38, 1
        %s365 = smul.addr %s364, 8
        %s366 = scalar_lea.vmem [#allocation2], %s365
        // Predicated region
        $region49: #{additive_attention.1} parent=47 // pred_check
          %p367 = pneg %p51
        $region50: #{additive_attention.1} parent=47 // pred_check_branch
          %369 = sbr.rel (%p367) target = $region52
        $region51: #{additive_attention.1} parent=47 // pred_region
          %371 = dma.done %s363, 128
        $region52: #{additive_attention.1} parent=47 // pred_fallthru
          _
        %s372 = sand.u32 %s30, 1
        %s373 = scalar_lea.sflag [#allocation6], %s372
        %s374 = sand.u32 %s64, 1
        %s375 = smul.addr %s374, 64
        %s376 = scalar_lea.vmem [#allocation5], %s375
        // Predicated region
        $region53: #{additive_attention.1} parent=47 // pred_check
          %p377 = pneg %p77
        $region54: #{additive_attention.1} parent=47 // pred_check_branch
          %379 = sbr.rel (%p377) target = $region56
        $region55: #{additive_attention.1} parent=47 // pred_region
          %381 = dma.done %s373, 1024
        $region56: #{additive_attention.1} parent=47 // pred_fallthru
          _
        %s382 = sand.u32 %s30, 1
        %s383 = scalar_lea.sflag [#allocation6], %s382
        %s384 = sand.u32 %s90, 1
        %s385 = smul.addr %s384, 64
        %s386 = scalar_lea.vmem [#allocation7], %s385
        // Predicated region
        $region57: #{additive_attention.1} parent=47 // pred_check
          %p387 = pneg %p103
        $region58: #{additive_attention.1} parent=47 // pred_check_branch
          %389 = sbr.rel (%p387) target = $region60
        $region59: #{additive_attention.1} parent=47 // pred_region
          %391 = dma.done %s383, 1024
        $region60: #{additive_attention.1} parent=47 // pred_fallthru
          _
        // Predicated region
        $region61: #{additive_attention.1} parent=47 // pred_check
          %p392 = pneg %p124
        $region62: #{additive_attention.1} parent=47 // pred_check_branch
          %394 = sbr.rel (%p392) target = $region64
        $region63: #{additive_attention.1} parent=47 // pred_region
          %396 = dma.done [#allocation9], 512
        $region64: #{additive_attention.1} parent=47 // pred_fallthru
          _
        // Predicated region
        $region65: #{additive_attention.1} parent=47 // pred_check
          %p397 = pneg %p145
        $region66: #{additive_attention.1} parent=47 // pred_check_branch
          %399 = sbr.rel (%p397) target = $region68
        $region67: #{additive_attention.1} parent=47 // pred_region
          %401 = dma.done [#allocation9], 512
        $region68: #{additive_attention.1} parent=47 // pred_fallthru
          _
        %s402 = sand.u32 %s38, 1
        %s403 = scalar_lea.sflag [#allocation3], %s402
        %s404 = sand.u32 %s38, 1
        %s405 = smul.addr %s404, 8
        %s406 = scalar_lea.vmem [#allocation2], %s405
        %p407 = pneg %p51
        %p408 = pneg %p48
        %s409 = sand.u32 %s30, 1
        %s410 = scalar_lea.sflag [#allocation6], %s409
        %s411 = sand.u32 %s64, 1
        %s412 = smul.addr %s411, 64
        %s413 = scalar_lea.vmem [#allocation5], %s412
        %p414 = pneg %p77
        %p415 = pneg %p74
        %s416 = sand.u32 %s30, 1
        %s417 = scalar_lea.sflag [#allocation6], %s416
        %s418 = sand.u32 %s90, 1
        %s419 = smul.addr %s418, 64
        %s420 = scalar_lea.vmem [#allocation7], %s419
        %p421 = pneg %p103
        %p422 = pneg %p100
        %p423 = pneg %p124
        %p424 = pneg %p121
        %p425 = pneg %p145
        %p426 = pneg %p142
        %p427 = pneg %p166
        %p428 = pneg %p163
        %p429 = pneg %p187
        %p430 = pneg %p184
        %p431 = pneg %p213
        %p432 = pneg %p210
        %s433 = sand.u32 %s200, 1
        %s434 = scalar_lea.sflag [#allocation4], %s433
        %s435 = sand.u32 %s200, 1
        %s436 = smul.addr %s435, 8
        %s437 = scalar_lea.vmem [#allocation11], %s436
        %p438 = pneg %p239
        %p439 = pneg %p236
        %p440 = scmp.lt.s32.totalorder %s30, 1
        %s441 = scalar_select %p440, %s30, 1
        %s442 = smul.addr %s441, 8
        %s443 = scalar_lea.vmem %s8, %s442
        %s444 = smul.u32 8, %s30
        %s445 = smul.u32 8, %s30
        %p446 = scmp.lt.s32.totalorder %s30, 1
        %s447 = scalar_select %p446, %s30, 1
        %s448 = smul.addr %s447, 8
        %s449 = scalar_lea.vmem %s8, %s448
        %v450 = vld [vmem:[%s366] sm:$0xff]
        %v451 = vld [vmem:[%s376] sm:$0xff]
        %v452 = vld [vmem:[%s376 + $0x8] sm:$0xff]
        %v453 = vld [vmem:[%s376 + $0x10] sm:$0xff]
        %v454 = vld [vmem:[%s376 + $0x18] sm:$0xff]
        %v455 = vld [vmem:[%s376 + $0x20] sm:$0xff]
        %v456 = vld [vmem:[%s376 + $0x28] sm:$0xff]
        %v457 = vld [vmem:[%s376 + $0x30] sm:$0xff]
        %v458 = vld [vmem:[%s376 + $0x38] sm:$0xff]
        %v459 = vld [vmem:[%s386] sm:$0xff]
        %v460 = vld [vmem:[%s386 + $0x8] sm:$0xff]
        %v461 = vld [vmem:[%s386 + $0x10] sm:$0xff]
        %v462 = vld [vmem:[%s386 + $0x18] sm:$0xff]
        %v463 = vld [vmem:[%s386 + $0x20] sm:$0xff]
        %v464 = vld [vmem:[%s386 + $0x28] sm:$0xff]
        %v465 = vld [vmem:[%s386 + $0x30] sm:$0xff]
        %v466 = vld [vmem:[%s386 + $0x38] sm:$0xff]
        %v467 = vld [vmem:[#allocation8] sm:$0xff]
        %v468 = vld [vmem:[#allocation8 + $0x8] sm:$0xff]
        %v469 = vld [vmem:[#allocation8 + $0x10] sm:$0xff]
        %v470 = vld [vmem:[#allocation8 + $0x18] sm:$0xff]
        %v471 = vld [vmem:[#allocation10] sm:$0xff]
        %v472 = vld [vmem:[#allocation10 + $0x8] sm:$0xff]
        %v473 = vld [vmem:[#allocation10 + $0x10] sm:$0xff]
        %v474 = vld [vmem:[#allocation10 + $0x18] sm:$0xff]
        %vm475 = vcmask 261120
        %v477 = vsel %vm475, %v451, 0
        %v480 = vsel %vm475, %v452, 0
        %v483 = vsel %vm475, %v453, 0
        %v486 = vsel %vm475, %v454, 0
        %v489 = vsel %vm475, %v455, 0
        %v492 = vsel %vm475, %v456, 0
        %v495 = vsel %vm475, %v457, 0
        %v498 = vsel %vm475, %v458, 0
        %v501 = vsel %vm475, %v471, 0
        %v504 = vsel %vm475, %v472, 0
        %v507 = vsel %vm475, %v473, 0
        %v510 = vsel %vm475, %v474, 0
        %512 = vmatpush.xpose.msra.mxu0 0.0
        %513 = vmatpush.xpose.msra.mxu0 0.0
        %514 = vmatpush.xpose.msra.mxu0 0.0
        %515 = vmatpush.xpose.msra.mxu0 0.0
        %516 = vmatpush.xpose.msra.mxu0 0.0
        %517 = vmatpush.xpose.msra.mxu0 0.0
        %518 = vmatpush.xpose.msra.mxu0 0.0
        %519 = vmatpush.xpose.msra.mxu0 0.0
        %520 = vmatpush.xpose.msra.mxu0 0.0
        %521 = vmatpush.xpose.msra.mxu0 0.0
        %522 = vmatpush.xpose.msra.mxu0 0.0
        %523 = vmatpush.xpose.msra.mxu0 0.0
        %524 = vmatpush.xpose.msra.mxu0 %v510
        %525 = vmatpush.xpose.msra.mxu0 %v507
        %526 = vmatpush.xpose.msra.mxu0 %v504
        %527 = vmatpush.xpose.msra.mxu0 %v501
        %528 = vmatmul.f32.gmra.mxu0 %v477
        %v529 = vpop.f32.mrf.mxu0
        %v530 = vadd.f32 0.0, %v529
        %531 = vmatmul.f32.gmra.mxu0 %v480
        %v532 = vpop.f32.mrf.mxu0
        %v533 = vadd.f32 0.0, %v532
        %534 = vmatmul.f32.gmra.mxu0 %v483
        %v535 = vpop.f32.mrf.mxu0
        %v536 = vadd.f32 0.0, %v535
        %537 = vmatmul.f32.gmra.mxu0 %v486
        %v538 = vpop.f32.mrf.mxu0
        %v539 = vadd.f32 0.0, %v538
        %540 = vmatmul.f32.gmra.mxu0 %v489
        %v541 = vpop.f32.mrf.mxu0
        %v542 = vadd.f32 0.0, %v541
        %543 = vmatmul.f32.gmra.mxu0 %v492
        %v544 = vpop.f32.mrf.mxu0
        %v545 = vadd.f32 0.0, %v544
        %546 = vmatmul.f32.gmra.mxu0 %v495
        %v547 = vpop.f32.mrf.mxu0
        %v548 = vadd.f32 0.0, %v547
        %549 = vmatmul.f32.gmra.mxu0 %v498
        %v550 = vpop.f32.mrf.mxu0
        %v551 = vadd.f32 0.0, %v550
        %552 = vdwg.mxu0
        %v553 = vld [vmem:[%s6] sm:$0x1]
        %v555 = vperm.slane %v553, 0
        %v558 = vsel %vm475, %v450, 0
        %v561 = vsel %vm475, %v467, 0
        %v564 = vsel %vm475, %v468, 0
        %v567 = vsel %vm475, %v469, 0
        %v570 = vsel %vm475, %v470, 0
        %572 = vmatpush.xpose.msra.mxu0 0.0
        %573 = vmatpush.xpose.msra.mxu0 0.0
        %574 = vmatpush.xpose.msra.mxu0 0.0
        %575 = vmatpush.xpose.msra.mxu0 0.0
        %576 = vmatpush.xpose.msra.mxu0 0.0
        %577 = vmatpush.xpose.msra.mxu0 0.0
        %578 = vmatpush.xpose.msra.mxu0 0.0
        %579 = vmatpush.xpose.msra.mxu0 0.0
        %580 = vmatpush.xpose.msra.mxu0 0.0
        %581 = vmatpush.xpose.msra.mxu0 0.0
        %582 = vmatpush.xpose.msra.mxu0 0.0
        %583 = vmatpush.xpose.msra.mxu0 0.0
        %584 = vmatpush.xpose.msra.mxu0 %v570
        %585 = vmatpush.xpose.msra.mxu0 %v567
        %586 = vmatpush.xpose.msra.mxu0 %v564
        %587 = vmatpush.xpose.msra.mxu0 %v561
        %588 = vmatmul.f32.gmra.mxu0 %v558
        %v589 = vpop.f32.mrf.mxu0
        %v590 = vadd.f32 %v555, %v589
        %591 = vdwg.mxu0
        %v593 = vrot.slane %v590, 1
        %v594 = vrot.slane %v590, 2
        %v595 = vrot.slane %v590, 3
        %v596 = vrot.slane %v590, 4
        %v597 = vrot.slane %v590, 5
        %v598 = vrot.slane %v590, 6
        %v599 = vrot.slane %v590, 7
        %v600 = vperm.slane %v590, 0
        %v601 = vperm.slane %v593, 0
        %v602 = vperm.slane %v594, 0
        %v603 = vperm.slane %v595, 0
        %v604 = vperm.slane %v596, 0
        %v605 = vperm.slane %v597, 0
        %v606 = vperm.slane %v598, 0
        %v607 = vperm.slane %v599, 0
        %v616 = vadd.f32 %v530, %v600
        %v617 = vadd.f32 %v533, %v601
        %v618 = vadd.f32 %v536, %v602
        %v619 = vadd.f32 %v539, %v603
        %v620 = vadd.f32 %v542, %v604
        %v621 = vadd.f32 %v545, %v605
        %v622 = vadd.f32 %v548, %v606
        %v623 = vadd.f32 %v551, %v607
        %v624 = vtanh.pop %v616
        %v625 = vtanh.pop %v617
        %v626 = vtanh.pop %v618
        %v627 = vtanh.pop %v619
        %v628 = vtanh.pop %v620
        %v629 = vtanh.pop %v621
        %v630 = vtanh.pop %v622
        %v631 = vtanh.pop %v623
        %v632 = vld [vmem:[%s5] sm:$0x1]
        %v634 = vperm.slane %v632, 0
        %v636 = vmul.f32 %v624, %v634
        %v637 = vmul.f32 %v625, %v634
        %v638 = vmul.f32 %v626, %v634
        %v639 = vmul.f32 %v627, %v634
        %v640 = vmul.f32 %v628, %v634
        %v641 = vmul.f32 %v629, %v634
        %v642 = vmul.f32 %v630, %v634
        %v643 = vmul.f32 %v631, %v634
        %v644 = vsel %vm475, %v636, 0.0
        %645 = vadd.xlane.f32.xlu0 %v644
        %v646 = vpop.xlane.xlu0 %645
        %v647 = vsel %vm475, %v637, 0.0
        %648 = vadd.xlane.f32.xlu0 %v647
        %v649 = vpop.xlane.xlu0 %648
        %v650 = vsel %vm475, %v638, 0.0
        %651 = vadd.xlane.f32.xlu0 %v650
        %v652 = vpop.xlane.xlu0 %651
        %v653 = vsel %vm475, %v639, 0.0
        %654 = vadd.xlane.f32.xlu0 %v653
        %v655 = vpop.xlane.xlu0 %654
        %v656 = vsel %vm475, %v640, 0.0
        %657 = vadd.xlane.f32.xlu0 %v656
        %v658 = vpop.xlane.xlu0 %657
        %v659 = vsel %vm475, %v641, 0.0
        %660 = vadd.xlane.f32.xlu0 %v659
        %v661 = vpop.xlane.xlu0 %660
        %v662 = vsel %vm475, %v642, 0.0
        %663 = vadd.xlane.f32.xlu0 %v662
        %v664 = vpop.xlane.xlu0 %663
        %v665 = vsel %vm475, %v643, 0.0
        %666 = vadd.xlane.f32.xlu0 %v665
        %v667 = vpop.xlane.xlu0 %666
        %v676 = vlaneseq
        %v677 = vand.u32 %v676, 127
        %v678 = vperm.slane %v646, %v677
        %v679 = vperm.slane %v649, %v677
        %v680 = vperm.slane %v652, %v677
        %v681 = vperm.slane %v655, %v677
        %v682 = vperm.slane %v658, %v677
        %v683 = vperm.slane %v661, %v677
        %v684 = vperm.slane %v664, %v677
        %v685 = vperm.slane %v667, %v677
        %vm686 = vcmask 1041409
        %v687 = vsel %vm686, %v679, %v678
        %vm688 = vcmask 1042434
        %v689 = vsel %vm688, %v680, %v687
        %vm690 = vcmask 1043459
        %v691 = vsel %vm690, %v681, %v689
        %vm692 = vcmask 1044484
        %v693 = vsel %vm692, %v682, %v691
        %vm694 = vcmask 1045509
        %v695 = vsel %vm694, %v683, %v693
        %vm696 = vcmask 1046534
        %v697 = vsel %vm696, %v684, %v695
        %vm698 = vcmask 1047559
        %v699 = vsel %vm698, %v685, %v697
        %vm701 = vcmask 64512
        %v702 = vsel %vm701, %v699, -inf
        %703 = vmax.xlane.f32.xlu0 %v702
        %v704 = vpop.xlane.xlu0 %703
        %v706 = vperm.slane %v704, 0
        %v707 = vperm.slane %v704, 1
        %v708 = vperm.slane %v704, 2
        %v709 = vperm.slane %v704, 3
        %v710 = vperm.slane %v704, 4
        %v711 = vperm.slane %v704, 5
        %v712 = vperm.slane %v704, 6
        %v713 = vperm.slane %v704, 7
        %v722 = vsub.f32 %v646, %v706
        %v723 = vsub.f32 %v649, %v707
        %v724 = vsub.f32 %v652, %v708
        %v725 = vsub.f32 %v655, %v709
        %v726 = vsub.f32 %v658, %v710
        %v727 = vsub.f32 %v661, %v711
        %v728 = vsub.f32 %v664, %v712
        %v729 = vsub.f32 %v667, %v713
        %v730 = vmul.f32 %v722, 1.442695
        %v731 = vpow.pop %v730
        %v732 = vmul.f32 %v723, 1.442695
        %v733 = vpow.pop %v732
        %v734 = vmul.f32 %v724, 1.442695
        %v735 = vpow.pop %v734
        %v736 = vmul.f32 %v725, 1.442695
        %v737 = vpow.pop %v736
        %v738 = vmul.f32 %v726, 1.442695
        %v739 = vpow.pop %v738
        %v740 = vmul.f32 %v727, 1.442695
        %v741 = vpow.pop %v740
        %v742 = vmul.f32 %v728, 1.442695
        %v743 = vpow.pop %v742
        %v744 = vmul.f32 %v729, 1.442695
        %v745 = vpow.pop %v744
        %754 = vset.pattern.permute.xlu0 0
        %755 = vperm.xlu0 %754, %v731
        %v756 = vpop.permute.xlu0 %755
        %757 = vset.pattern.permute.xlu0 0
        %758 = vperm.xlu0 %757, %v733
        %v759 = vpop.permute.xlu0 %758
        %760 = vset.pattern.permute.xlu0 0
        %761 = vperm.xlu0 %760, %v735
        %v762 = vpop.permute.xlu0 %761
        %763 = vset.pattern.permute.xlu0 0
        %764 = vperm.xlu0 %763, %v737
        %v765 = vpop.permute.xlu0 %764
        %766 = vset.pattern.permute.xlu0 0
        %767 = vperm.xlu0 %766, %v739
        %v768 = vpop.permute.xlu0 %767
        %769 = vset.pattern.permute.xlu0 0
        %770 = vperm.xlu0 %769, %v741
        %v771 = vpop.permute.xlu0 %770
        %772 = vset.pattern.permute.xlu0 0
        %773 = vperm.xlu0 %772, %v743
        %v774 = vpop.permute.xlu0 %773
        %775 = vset.pattern.permute.xlu0 0
        %776 = vperm.xlu0 %775, %v745
        %v777 = vpop.permute.xlu0 %776
        %v778 = vperm.slane %v756, %v677
        %v779 = vperm.slane %v759, %v677
        %v780 = vperm.slane %v762, %v677
        %v781 = vperm.slane %v765, %v677
        %v782 = vperm.slane %v768, %v677
        %v783 = vperm.slane %v771, %v677
        %v784 = vperm.slane %v774, %v677
        %v785 = vperm.slane %v777, %v677
        %v786 = vsel %vm686, %v779, %v778
        %v787 = vsel %vm688, %v780, %v786
        %v788 = vsel %vm690, %v781, %v787
        %v789 = vsel %vm692, %v782, %v788
        %v790 = vsel %vm694, %v783, %v789
        %v791 = vsel %vm696, %v784, %v790
        %v792 = vsel %vm698, %v785, %v791
        %v794 = vsel %vm701, %v792, 0.0
        %795 = vadd.xlane.f32.xlu0 %v794
        %v796 = vpop.xlane.xlu0 %795
        %v797 = vrcp.pop %v796
        %v799 = vperm.slane %v797, 0
        %v800 = vperm.slane %v797, 1
        %v801 = vperm.slane %v797, 2
        %v802 = vperm.slane %v797, 3
        %v803 = vperm.slane %v797, 4
        %v804 = vperm.slane %v797, 5
        %v805 = vperm.slane %v797, 6
        %v806 = vperm.slane %v797, 7
        %v815 = vmul.f32 %v731, %v799
        %v816 = vmul.f32 %v733, %v800
        %v817 = vmul.f32 %v735, %v801
        %v818 = vmul.f32 %v737, %v802
        %v819 = vmul.f32 %v739, %v803
        %v820 = vmul.f32 %v741, %v804
        %v821 = vmul.f32 %v743, %v805
        %v822 = vmul.f32 %v745, %v806
        %824 = vset.pattern.permute.xlu0 0
        %825 = vperm.xlu0 %824, %v815
        %v826 = vpop.permute.xlu0 %825
        %829 = vset.pattern.permute.xlu0 0
        %830 = vperm.xlu0 %829, %v816
        %v831 = vpop.permute.xlu0 %830
        %834 = vset.pattern.permute.xlu0 0
        %835 = vperm.xlu0 %834, %v817
        %v836 = vpop.permute.xlu0 %835
        %839 = vset.pattern.permute.xlu0 0
        %840 = vperm.xlu0 %839, %v818
        %v841 = vpop.permute.xlu0 %840
        %844 = vset.pattern.permute.xlu0 0
        %845 = vperm.xlu0 %844, %v819
        %v846 = vpop.permute.xlu0 %845
        %849 = vset.pattern.permute.xlu0 0
        %850 = vperm.xlu0 %849, %v820
        %v851 = vpop.permute.xlu0 %850
        %854 = vset.pattern.permute.xlu0 0
        %855 = vperm.xlu0 %854, %v821
        %v856 = vpop.permute.xlu0 %855
        %859 = vset.pattern.permute.xlu0 0
        %860 = vperm.xlu0 %859, %v822
        %v861 = vpop.permute.xlu0 %860
        %v863 = vmul.f32 %v826, %v459
        %v864 = vmul.f32 %v831, %v460
        %v865 = vmul.f32 %v836, %v461
        %v866 = vmul.f32 %v841, %v462
        %v867 = vmul.f32 %v846, %v463
        %v868 = vmul.f32 %v851, %v464
        %v869 = vmul.f32 %v856, %v465
        %v870 = vmul.f32 %v861, %v466
        %v871 = vsel %vm475, %v863, 0.0
        %v872 = vrot.slane %v871, 4
        %v873 = vadd.f32 %v871, %v872
        %v874 = vrot.slane %v873, 2
        %v875 = vadd.f32 %v873, %v874
        %v876 = vrot.slane %v875, 1
        %v877 = vadd.f32 %v875, %v876
        %v878 = vsel %vm475, %v864, 0.0
        %v879 = vrot.slane %v878, 4
        %v880 = vadd.f32 %v878, %v879
        %v881 = vrot.slane %v880, 2
        %v882 = vadd.f32 %v880, %v881
        %v883 = vrot.slane %v882, 1
        %v884 = vadd.f32 %v882, %v883
        %v885 = vsel %vm475, %v865, 0.0
        %v886 = vrot.slane %v885, 4
        %v887 = vadd.f32 %v885, %v886
        %v888 = vrot.slane %v887, 2
        %v889 = vadd.f32 %v887, %v888
        %v890 = vrot.slane %v889, 1
        %v891 = vadd.f32 %v889, %v890
        %v892 = vsel %vm475, %v866, 0.0
        %v893 = vrot.slane %v892, 4
        %v894 = vadd.f32 %v892, %v893
        %v895 = vrot.slane %v894, 2
        %v896 = vadd.f32 %v894, %v895
        %v897 = vrot.slane %v896, 1
        %v898 = vadd.f32 %v896, %v897
        %v899 = vsel %vm475, %v867, 0.0
        %v900 = vrot.slane %v899, 4
        %v901 = vadd.f32 %v899, %v900
        %v902 = vrot.slane %v901, 2
        %v903 = vadd.f32 %v901, %v902
        %v904 = vrot.slane %v903, 1
        %v905 = vadd.f32 %v903, %v904
        %v906 = vsel %vm475, %v868, 0.0
        %v907 = vrot.slane %v906, 4
        %v908 = vadd.f32 %v906, %v907
        %v909 = vrot.slane %v908, 2
        %v910 = vadd.f32 %v908, %v909
        %v911 = vrot.slane %v910, 1
        %v912 = vadd.f32 %v910, %v911
        %v913 = vsel %vm475, %v869, 0.0
        %v914 = vrot.slane %v913, 4
        %v915 = vadd.f32 %v913, %v914
        %v916 = vrot.slane %v915, 2
        %v917 = vadd.f32 %v915, %v916
        %v918 = vrot.slane %v917, 1
        %v919 = vadd.f32 %v917, %v918
        %v920 = vsel %vm475, %v870, 0.0
        %v921 = vrot.slane %v920, 4
        %v922 = vadd.f32 %v920, %v921
        %v923 = vrot.slane %v922, 2
        %v924 = vadd.f32 %v922, %v923
        %v925 = vrot.slane %v924, 1
        %v926 = vadd.f32 %v924, %v925
        %v927 = vrot.slane %v450, 1
        %v928 = vrot.slane %v450, 2
        %v929 = vrot.slane %v450, 3
        %v930 = vrot.slane %v450, 4
        %v931 = vrot.slane %v450, 5
        %v932 = vrot.slane %v450, 6
        %v933 = vrot.slane %v450, 7
        %v942 = vadd.f32 %v877, %v450
        %v943 = vadd.f32 %v884, %v927
        %v944 = vadd.f32 %v891, %v928
        %v945 = vadd.f32 %v898, %v929
        %v946 = vadd.f32 %v905, %v930
        %v947 = vadd.f32 %v912, %v931
        %v948 = vadd.f32 %v919, %v932
        %v949 = vadd.f32 %v926, %v933
        %v958 = vrot.slane %v943, 7
        %v959 = vsel %vm686, %v958, %v942
        %v960 = vrot.slane %v944, 6
        %v961 = vsel %vm688, %v960, %v959
        %v962 = vrot.slane %v945, 5
        %v963 = vsel %vm690, %v962, %v961
        %v964 = vrot.slane %v946, 4
        %v965 = vsel %vm692, %v964, %v963
        %v966 = vrot.slane %v947, 3
        %v967 = vsel %vm694, %v966, %v965
        %v968 = vrot.slane %v948, 2
        %v969 = vsel %vm696, %v968, %v967
        %v970 = vrot.slane %v949, 1
        %v971 = vsel %vm698, %v970, %v969
        %973 = vst.msk [vmem:[%s437] sm:$0xff] %vm475, %v971
        %v974 = vperm.slane %v826, %v677
        %v975 = vperm.slane %v831, %v677
        %v976 = vperm.slane %v836, %v677
        %v977 = vperm.slane %v841, %v677
        %v978 = vperm.slane %v846, %v677
        %v979 = vperm.slane %v851, %v677
        %v980 = vperm.slane %v856, %v677
        %v981 = vperm.slane %v861, %v677
        %v982 = vsel %vm686, %v975, %v974
        %v983 = vsel %vm688, %v976, %v982
        %v984 = vsel %vm690, %v977, %v983
        %v985 = vsel %vm692, %v978, %v984
        %v986 = vsel %vm694, %v979, %v985
        %v987 = vsel %vm696, %v980, %v986
        %v988 = vsel %vm698, %v981, %v987
        %990 = vst.msk [vmem:[%s449] sm:$0xff] %vm701, %v988
        %s991 = sand.u32 %s200, 1
        %s992 = scalar_lea.sflag [#allocation4], %s991
        %s993 = sand.u32 %s200, 1
        %s994 = smul.addr %s993, 8
        %s995 = scalar_lea.vmem [#allocation11], %s994
        %p996 = scmp.lt.s32.totalorder %s30, 1
        %s997 = scalar_select %p996, %s30, 1
        %s998 = smul.addr %s997, 8
        %s999 = scalar_lea.vmem %s8, %s998
        // Predicated region
        $region69: #{additive_attention.1} parent=47 // pred_check
          %p1000 = pneg %p210
        $region70: #{additive_attention.1} parent=47 // pred_check_branch
          %1002 = sbr.rel (%p1000) target = $region72
        $region71: #{additive_attention.1} parent=47 // pred_region
          %1004 = vsyncadd %s992, 0
          %s1005 = smul.addr %s30, 8
          %s1006 = scalar_lea.hbm %s7, %s1005
          %s1008 = sshll.u32 %s995, 4
          %s1009 = int_to_ptr.vmem [resolvable:$true] %s1008
          %s1010 = sshll.u32 %s1006, 4
          %s1011 = int_to_ptr.hbm [resolvable:$true] %s1010
          %1013 = dma.vmem_to_hbm [thread:$0]  %s1009, 128, %s1011, %s992
        $region72: #{additive_attention.1} parent=47 // pred_fallthru
          _
        // Predicated region
        $region73: #{additive_attention.1} parent=47 // pred_check
          %p1014 = pneg %p236
        $region74: #{additive_attention.1} parent=47 // pred_check_branch
          %1016 = sbr.rel (%p1014) target = $region76
        $region75: #{additive_attention.1} parent=47 // pred_region
          _
        $region76: #{additive_attention.1} parent=47 // pred_fallthru
          _
      $region48: #{additive_attention.1} parent=5 // pred_fallthru
        _
      %p1017 = scmp.le.s32.totalorder 2, %s25
      // Predicated region
      $region77: #{additive_attention.1} parent=5 // pred_check
        %p1018 = pneg %p1017
      $region78: #{additive_attention.1} parent=5 // pred_check_branch
        %1020 = sbr.rel (%p1018) target = $region80
      $region79: #{additive_attention.1} parent=5 // pred_region
        %s1021 = ssub.s32 %s25, 2
        // Predicated region
        $region81: #{additive_attention.1} parent=79 // pred_check
          %p1022 = pneg %p216
        $region82: #{additive_attention.1} parent=79 // pred_check_branch
          %1024 = sbr.rel (%p1022) target = $region84
        $region83: #{additive_attention.1} parent=79 // pred_region
          %s1025 = sand.u32 %s201, 1
          %s1026 = scalar_lea.sflag [#allocation4], %s1025
          %s1027 = sand.u32 %s201, 1
          %s1028 = smul.addr %s1027, 8
          %s1029 = scalar_lea.vmem [#allocation11], %s1028
          %1031 = dma.done %s1026, 128
        $region84: #{additive_attention.1} parent=79 // pred_fallthru
          _
        // Predicated region
        $region85: #{additive_attention.1} parent=79 // pred_check
          %p1032 = pneg %p242
        $region86: #{additive_attention.1} parent=79 // pred_check_branch
          %1034 = sbr.rel (%p1032) target = $region88
        $region87: #{additive_attention.1} parent=79 // pred_region
          %p1035 = scmp.lt.s32.totalorder %s31, 1
          %s1036 = scalar_select %p1035, %s31, 1
          %s1037 = smul.addr %s1036, 8
          %s1038 = scalar_lea.vmem %s8, %s1037
        $region88: #{additive_attention.1} parent=79 // pred_fallthru
          _
      $region80: #{additive_attention.1} parent=5 // pred_fallthru
        _
    $region6: #{additive_attention.1} parent=1 // loop_footer
      %s29 = sadd.s32 1, %s25
    $region7: #{additive_attention.1} parent=1 // loop_footer_branch
      %24 = sbr.rel target = $region3
    $region8: #{additive_attention.1} parent=1 // loop_exit
      _
    %1039 = vsyncpa [#allocation3], 1
    %s1040 = scalar_lea.sflag [#allocation3], 1
    %1041 = vsyncpa %s1040, 1
    %1042 = vsyncpa [#allocation6], 1
    %s1043 = scalar_lea.sflag [#allocation6], 1
    %1044 = vsyncpa %s1043, 1
    %1045 = vsyncpa [#allocation9], 1
    %1046 = vsyncpa [#allocation4], 1
    %s1047 = scalar_lea.sflag [#allocation4], 1
    %1048 = vsyncpa %s1047, 1

</llo_original>
